<compile_context>
chip_gen: v7x
topology: tpu7x:2x2x1
jax: 0.10.0
libtpu: 0.0.40
codegen_flags: <defaults>
</compile_context>

<pallas_src>
import math

import jax
import jax.numpy as jnp
from jax.experimental import pallas as pl
from jax.experimental.pallas import tpu as pltpu


def _add_kernel(x_ref, y_ref, o_ref):
    # Cast on the loaded tiles (VPU work, hidden under the DMA), then add.
    o_ref[...] = x_ref[...].astype(o_ref.dtype) + y_ref[...].astype(o_ref.dtype)


def _pallas_add_flat(xf, yf, lane, out_dtype):
    """Lane-dense (rows, lane) elementwise add; len(xf) must be a multiple of lane."""
    n = xf.shape[0]
    rows = n // lane
    x2 = xf.reshape(rows, lane)
    y2 = yf.reshape(rows, lane)
    out_item = jnp.dtype(out_dtype).itemsize

    # Sublane multiple: sub-32-bit dtypes pack along sublanes (bf16 native tile
    # is (16,128), int8/fp8 (32,128)); rounding tr to the packed multiple avoids
    # relayout / masked partial-sublane edge stores on 16/8-bit paths.
    min_item = min(x2.dtype.itemsize, y2.dtype.itemsize, out_item)
    sublane = max(8, 32 // max(1, min_item))

    # ~4 MiB per widest-dtype block (amortizes the ~0.35 us per-step overhead;
    # biggest relative win on v7x where a 1 MiB step is ~1 us of HBM time).
    max_item = max(x2.dtype.itemsize, y2.dtype.itemsize, out_item)
    target_bytes = 4 << 20
    tr = max(sublane, (target_bytes // (lane * max_item)) // sublane * sublane)
    if rows <= tr:
        if rows >= 2 * sublane:
            # Split mid-size arrays into 2 blocks so both v7x TensorCores get
            # work on the "parallel" grid axis (a single block serializes).
            half = (rows + 1) // 2
            tr = ((half + sublane - 1) // sublane) * sublane
        else:
            tr = rows  # block dim == full array dim is always legal

    grid = (pl.cdiv(rows, tr),)

    # Explicit scoped-VMEM limit: double-buffered x + y + out blocks plus
    # margin; capped at 32 MiB so it is safe on v5e/v6e (128 MiB physical) and
    # v7x (64 MiB physical, 32 MiB scoped default).
    block_bytes = tr * lane * (x2.dtype.itemsize + y2.dtype.itemsize + out_item)
    vmem_limit = int(min(32 << 20, max(16 << 20, 2 * block_bytes + (2 << 20))))

    bytes_accessed = n * (x2.dtype.itemsize + y2.dtype.itemsize + out_item)
    cost = pl.CostEstimate(flops=n, transcendentals=0, bytes_accessed=bytes_accessed)

    out2 = pl.pallas_call(
        _add_kernel,
        out_shape=jax.ShapeDtypeStruct((rows, lane), out_dtype),
        grid=grid,
        in_specs=[
            pl.BlockSpec((tr, lane), lambda i: (i, 0)),
            pl.BlockSpec((tr, lane), lambda i: (i, 0)),
        ],
        out_specs=pl.BlockSpec((tr, lane), lambda i: (i, 0)),
        compiler_params=pltpu.CompilerParams(
            dimension_semantics=("parallel",),  # shards blocks across TCs on v7x
            vmem_limit_bytes=vmem_limit,
        ),
        cost_estimate=cost,
    )(x2, y2)
    return out2.reshape(n)


def pallas_sum(x, y):
    """Elementwise x + y (megatransformer Sum.forward) via a Pallas TPU kernel."""
    x = jnp.asarray(x)
    y = jnp.asarray(y)
    out_shape = jnp.broadcast_shapes(x.shape, y.shape)
    # TODO(synk): jnp.promote_types can differ from torch promotion in exotic
    # mixed int/bool cases; matches the usual float/bf16/int combinations.
    out_dtype = jnp.promote_types(x.dtype, y.dtype)

    # Broadcasting path: materializing the broadcast operand in HBM just to
    # feed the kernel costs more than the kernel saves on a bandwidth-bound op,
    # so let XLA's fused add handle it (per perf review).
    if x.shape != out_shape or y.shape != out_shape:
        return (x + y).astype(out_dtype)

    n = math.prod(out_shape)
    if n == 0:
        return jnp.zeros(out_shape, dtype=out_dtype)

    # Lane-dense re-view: widest lane width (multiple of 128) that divides n.
    lane = 0
    for cand in (4096, 2048, 1024, 512, 256, 128):
        if n % cand == 0:
            lane = cand
            break
    if lane == 0:
        # Awkward total size: XLA's fused add is already at the 3n-byte HBM
        # minimum; padding/slicing around the kernel would add whole-array
        # passes, so just fall back for this rare case.
        return (x + y).astype(out_dtype)

    out_flat = _pallas_add_flat(x.reshape(n), y.reshape(n), lane, out_dtype)
    return out_flat.reshape(out_shape)


if __name__ == "__main__":
    key = jax.random.PRNGKey(0)
    kx, ky = jax.random.split(key)

    # Primary check: equal-shape f32 (typical residual-add use).
    x = jax.random.normal(kx, (2, 4, 16, 16), dtype=jnp.float32)
    y = jax.random.normal(ky, (2, 4, 16, 16), dtype=jnp.float32)
    out = pallas_sum(x, y)
    jax.block_until_ready(out)
    ref = x + y
    assert out.shape == ref.shape and out.dtype == ref.dtype
    assert jnp.allclose(out, ref, atol=1e-6, rtol=1e-6)

    # Mixed-dtype, equal-shape path (bf16 + f32 -> f32), still through the kernel.
    xb = x.astype(jnp.bfloat16)
    out_m = pallas_sum(xb, y)
    jax.block_until_ready(out_m)
    ref_m = xb + y
    assert out_m.shape == ref_m.shape and out_m.dtype == ref_m.dtype
    assert jnp.allclose(out_m, ref_m, atol=1e-6, rtol=1e-6)

    # Multi-block path: 2 blocks on the "parallel" grid axis (v7x megacore split).
    x2 = jax.random.normal(kx, (256, 512), dtype=jnp.float32)
    y2 = jax.random.normal(ky, (256, 512), dtype=jnp.float32)
    out2 = pallas_sum(x2, y2)
    jax.block_until_ready(out2)
    assert jnp.allclose(out2, x2 + y2, atol=1e-6, rtol=1e-6)

    # Broadcast path (falls back to fused XLA add; same Sum semantics).
    yb = jax.random.normal(ky, (1, 4, 1, 16), dtype=jnp.float32)
    out_b = pallas_sum(x, yb)
    jax.block_until_ready(out_b)
    ref_b = x + yb
    assert out_b.shape == ref_b.shape and out_b.dtype == ref_b.dtype
    assert jnp.allclose(out_b, ref_b, atol=1e-6, rtol=1e-6)

    print("KERNEL_OK")
</pallas_src>

<mosaic_0001>
module attributes {stable_mosaic.version = 11 : i64} {
  func.func @_add_kernel(%arg0: i32, %arg1: memref<1x2048xf32, #tpu.memory_space<vmem>>, %arg2: memref<1x2048xf32, #tpu.memory_space<vmem>>, %arg3: memref<1x2048xf32, #tpu.memory_space<vmem>>) attributes {dimension_semantics = [#tpu.dimension_semantics<parallel>], iteration_bounds = array<i64: 1>, scalar_prefetch = 0 : i64, scratch_operands = 0 : i64, tpu.core_type = #tpu.core_type<tc>, window_params = [{transform_indices = @transform_0, window_bounds = array<i64: 1, 2048>}, {transform_indices = @transform_1, window_bounds = array<i64: 1, 2048>}, {transform_indices = @transform_2, window_bounds = array<i64: 1, 2048>}]} {
    %c0 = arith.constant 0 : index
    %c0_0 = arith.constant 0 : index
    %0 = vector.load %arg1[%c0, %c0_0] : memref<1x2048xf32, #tpu.memory_space<vmem>>, vector<1x2048xf32>
    %c0_1 = arith.constant 0 : index
    %c0_2 = arith.constant 0 : index
    %1 = vector.load %arg2[%c0_1, %c0_2] : memref<1x2048xf32, #tpu.memory_space<vmem>>, vector<1x2048xf32>
    %2 = arith.addf %0, %1 : vector<1x2048xf32>
    %c0_3 = arith.constant 0 : index
    %c0_4 = arith.constant 0 : index
    %3 = vector.load %arg3[%c0_3, %c0_4] : memref<1x2048xf32, #tpu.memory_space<vmem>>, vector<1x2048xf32>
    tpu.vector_store %arg3[%c0_3, %c0_4], %2 {strides = array<i32>} : memref<1x2048xf32, #tpu.memory_space<vmem>>, vector<1x2048xf32>,
    return
  }
  func.func @transform_0(%arg0: i32) -> (i32, i32) {
    %c0_i32 = arith.constant 0 : i32
    %c0_i32_0 = arith.constant 0 : i32
    return %arg0, %c0_i32 : i32, i32
  }
  func.func @transform_1(%arg0: i32) -> (i32, i32) {
    %c0_i32 = arith.constant 0 : i32
    %c0_i32_0 = arith.constant 0 : i32
    return %arg0, %c0_i32 : i32, i32
  }
  func.func @transform_2(%arg0: i32) -> (i32, i32) {
    %c0_i32 = arith.constant 0 : i32
    %c0_i32_0 = arith.constant 0 : i32
    return %arg0, %c0_i32 : i32, i32
  }
}

</mosaic_0001>

<llo_original>
// kernel: tpu_custom_call.1
$region0: #{tpu_custom_call.1}
  #allocation0 [shape = 'u32[]', space=smem, size = 0x4, offset = 0x4, fixed_abs, tag = 'smem constant byte address 0x4 - core index']
  #allocation1 [shape = 'u32[144,128]{1,0:T(1,128)}', space=vmem, size = 0x12000, scoped, tag = 'internal scratch']
  %s0 = inlined_call_operand.hbm [shape: f32[1,2048], index: 0, kind: input, shape index: {}]
  %s1 = inlined_call_operand.hbm [shape: f32[1,2048], index: 1, kind: input, shape index: {}]
  %s2 = inlined_call_operand.hbm [shape: f32[1,2048], index: 2, kind: output, shape index: {}]
  %s3 = sld [smem:[#allocation0]]
  $region26: #{tpu_custom_call.1} parent=0
    _
  %s5 = ssub.s32 1, %s3
  %s6 = scalar_select 0, %s5, %s3
  $region1: #{tpu_custom_call.1} parent=0
    #allocation2 [shape = 'u8[8192]{0}', space=vmem, size = 0x2000, scoped, tag = 'input window, operand 0, single buffered']
    #allocation3 [shape = 's32[1]{0}', space=sflag, size = 0x4, scoped, tag = 'scoped memory for tpu_custom_call.1']
    #allocation4 [shape = 's32[1]{0}', space=sflag, size = 0x4, scoped, tag = 'scoped memory for tpu_custom_call.1']
    #allocation5 [shape = 'u8[8192]{0}', space=vmem, size = 0x2000, scoped, tag = 'input window, operand 1, single buffered']
    #allocation6 [shape = 's32[1]{0}', space=sflag, size = 0x4, scoped, tag = 'scoped memory for tpu_custom_call.1']
    #allocation7 [shape = 'u8[8192]{0}', space=vmem, size = 0x2000, scoped, tag = 'output window, operand 0, single buffered']
    %7 = vsyncpa [#allocation3], 0
    %8 = vsyncpa [#allocation6], 0
    %9 = vsyncpa [#allocation4], 0
    // Predicated region
    $region2: #{tpu_custom_call.1} parent=1 // pred_check
      _
    $region3: #{tpu_custom_call.1} parent=1 // pred_check_branch
      %11 = sbr.rel (0) target = $region5
    $region4: #{tpu_custom_call.1} parent=1 // pred_region
      %s13 = ssub.s32 256, 256
      %14 = vsyncadd [#allocation3], %s13
      %s16 = sshll.u32 [#allocation2], 4
      %s17 = int_to_ptr.vmem [resolvable:$true] %s16
      %19 = dma.hbm_to_vmem [thread:$0]  %s0, 256, %s17, [#allocation3]
    $region5: #{tpu_custom_call.1} parent=1 // pred_fallthru
      _
    // Predicated region
    $region6: #{tpu_custom_call.1} parent=1 // pred_check
      _
    $region7: #{tpu_custom_call.1} parent=1 // pred_check_branch
      %21 = sbr.rel (0) target = $region9
    $region8: #{tpu_custom_call.1} parent=1 // pred_region
      %s23 = ssub.s32 256, 256
      %24 = vsyncadd [#allocation6], %s23
      %s26 = sshll.u32 [#allocation5], 4
      %s27 = int_to_ptr.vmem [resolvable:$true] %s26
      %29 = dma.hbm_to_vmem [thread:$0]  %s1, 256, %s27, [#allocation6]
    $region9: #{tpu_custom_call.1} parent=1 // pred_fallthru
      _
    // Predicated region
    $region10: #{tpu_custom_call.1} parent=1 // pred_check
      _
    $region11: #{tpu_custom_call.1} parent=1 // pred_check_branch
      %31 = sbr.rel (0) target = $region13
    $region12: #{tpu_custom_call.1} parent=1 // pred_region
      %32 = dma.done [#allocation3], 256
    $region13: #{tpu_custom_call.1} parent=1 // pred_fallthru
      _
    // Predicated region
    $region14: #{tpu_custom_call.1} parent=1 // pred_check
      _
    $region15: #{tpu_custom_call.1} parent=1 // pred_check_branch
      %34 = sbr.rel (0) target = $region17
    $region16: #{tpu_custom_call.1} parent=1 // pred_region
      %35 = dma.done [#allocation6], 256
    $region17: #{tpu_custom_call.1} parent=1 // pred_fallthru
      _
    %v36 = vld [vmem:[#allocation2] sm:$0xff]
    %v37 = vld [vmem:[#allocation2 + $0x8] sm:$0xff]
    %v38 = vld [vmem:[#allocation5] sm:$0xff]
    %v39 = vld [vmem:[#allocation5 + $0x8] sm:$0xff]
    %v40 = vadd.f32 %v36, %v38
    %v41 = vadd.f32 %v37, %v39
    %42 = vst [vmem:[#allocation7] sm:$0xff] %v40
    %43 = vst [vmem:[#allocation7 + $0x8] sm:$0xff] %v41
    // Predicated region
    $region18: #{tpu_custom_call.1} parent=1 // pred_check
      _
    $region19: #{tpu_custom_call.1} parent=1 // pred_check_branch
      %45 = sbr.rel (0) target = $region21
    $region20: #{tpu_custom_call.1} parent=1 // pred_region
      %s47 = ssub.s32 256, 256
      %48 = vsyncadd [#allocation4], %s47
      %s50 = sshll.u32 [#allocation7], 4
      %s51 = int_to_ptr.vmem [resolvable:$true] %s50
      %53 = dma.vmem_to_hbm [thread:$0]  %s51, 256, %s2, [#allocation4]
    $region21: #{tpu_custom_call.1} parent=1 // pred_fallthru
      _
    // Predicated region
    $region22: #{tpu_custom_call.1} parent=1 // pred_check
      _
    $region23: #{tpu_custom_call.1} parent=1 // pred_check_branch
      %55 = sbr.rel (0) target = $region25
    $region24: #{tpu_custom_call.1} parent=1 // pred_region
      %56 = dma.done [#allocation4], 256
    $region25: #{tpu_custom_call.1} parent=1 // pred_fallthru
      _
    %57 = vsyncpa [#allocation3], 1
    %58 = vsyncpa [#allocation6], 1
    %59 = vsyncpa [#allocation4], 1

</llo_original>
